<compile_context>
chip_gen: v7x
topology: tpu7x:2x2x1
jax: 0.10.0
libtpu: 0.0.40
codegen_flags: <defaults>
</compile_context>

<pallas_src>
import jax
import jax.numpy as jnp
from jax import lax
from jax.experimental import pallas as pl
from jax.experimental.pallas import tpu as pltpu


LANE = 128                        # lane-dense last dim (vreg lane width)
BLOCK_BYTES = 4 * 1024 * 1024     # ~4 MiB per block (per buffer)
VMEM_LIMIT_BYTES = 40 * 1024 * 1024


def _smish_kernel(x_ref, o_ref):
    # smish(x) = x * tanh(log1p(sigmoid(x))), computed in f32.
    # With s = sigmoid(x) in (0,1):
    #   tanh(log1p(s)) = ((1+s)^2 - 1) / ((1+s)^2 + 1) = (s^2 + 2s) / (s^2 + 2s + 2)
    x = x_ref[...].astype(jnp.float32)
    s = jax.nn.sigmoid(x)                     # single EUP exp + VPU
    u = s * (s + 2.0)                         # VPU
    d = u + 2.0                               # in (2, 5)
    r = pl.reciprocal(d, approx=True)         # EUP vrcp (free slot)
    r = r * (2.0 - d * r)                     # one Newton step -> ~4e-9 rel err
    o_ref[...] = (x * u * r).astype(o_ref.dtype)


def _smish_jnp(x):
    """Pure-jnp reference / tiny-tail fallback."""
    xf = x.astype(jnp.float32)
    return (xf * jnp.tanh(jnp.log1p(jax.nn.sigmoid(xf)))).astype(x.dtype)


def _sublane_pack(itemsize):
    # rows-per-vreg packing factor: f32 -> 8, bf16 -> 16, int8/fp8 -> 32
    return {4: 8, 2: 16, 1: 32}.get(itemsize, 8)


def _smish_2d(x2d):
    """Run the Pallas kernel on a (rows, LANE) lane-dense slab."""
    rows, lane = x2d.shape
    itemsize = jnp.dtype(x2d.dtype).itemsize
    pack = _sublane_pack(itemsize)

    # dtype-aware block rows targeting BLOCK_BYTES per block
    target_rows = max(pack, (BLOCK_BYTES // (lane * itemsize)) // pack * pack)

    if rows <= pack:
        block_rows = rows                       # full-extent block (allowed)
    elif rows <= target_rows:
        # whole slab fits in one block: still split into 2-4 blocks so the
        # grid can shard across TensorCores (v7x) and pipeline DMA/compute.
        nblk = max(2, min(4, rows // pack))
        block_rows = pl.cdiv(pl.cdiv(rows, nblk), pack) * pack
    else:
        block_rows = target_rows
    grid = (pl.cdiv(rows, block_rows),)

    n = rows * lane
    cost = pl.CostEstimate(flops=10 * n, transcendentals=2 * n,
                           bytes_accessed=2 * n * itemsize)

    return pl.pallas_call(
        _smish_kernel,
        out_shape=jax.ShapeDtypeStruct((rows, lane), x2d.dtype),
        grid_spec=pltpu.PrefetchScalarGridSpec(
            num_scalar_prefetch=0,
            grid=grid,
            in_specs=[pl.BlockSpec((block_rows, lane), lambda i: (i, 0))],
            out_specs=pl.BlockSpec((block_rows, lane), lambda i: (i, 0)),
        ),
        compiler_params=pltpu.CompilerParams(
            dimension_semantics=("parallel",),
            vmem_limit_bytes=VMEM_LIMIT_BYTES,
        ),
        cost_estimate=cost,
    )(x2d)


def smish(x):
    """Smish applied elementwise. Any shape / float dtype."""
    orig_shape = x.shape
    n = x.size
    if n == 0:
        return x
    flat = x.reshape(-1)
    n_bulk = (n // LANE) * LANE

    if n_bulk == n:
        # Fast path: no padding, no extra HBM passes.
        return _smish_2d(flat.reshape(n // LANE, LANE)).reshape(orig_shape)

    # Ragged path: lane-aligned bulk through the kernel; only the <LANE tail
    # is computed with plain jnp (no full-tensor pad / slice passes).
    parts = []
    if n_bulk > 0:
        bulk = lax.slice(flat, (0,), (n_bulk,))
        parts.append(_smish_2d(bulk.reshape(n_bulk // LANE, LANE)).reshape(-1))
    tail = lax.slice(flat, (n_bulk,), (n,))
    parts.append(_smish_jnp(tail))
    return jnp.concatenate(parts).reshape(orig_shape)


if __name__ == "__main__":
    key = jax.random.PRNGKey(0)
    # NCHW input, same convention as the PyTorch module's typical usage in TEED.
    x = jax.random.normal(key, (2, 4, 16, 16), dtype=jnp.float32)
    out = smish(x)
    jax.block_until_ready(out)
    ref = _smish_jnp(x)
    assert out.shape == x.shape and out.dtype == x.dtype
    assert jnp.allclose(out, ref, atol=1e-5, rtol=1e-5)

    # Ragged element count + bf16 I/O: 128-element bulk via kernel, 37-element
    # tail via the jnp fallback (exercises both branches of the ragged path).
    x2 = jax.random.normal(jax.random.PRNGKey(1), (3, 5, 11), dtype=jnp.bfloat16)
    out2 = smish(x2)
    jax.block_until_ready(out2)
    ref2 = _smish_jnp(x2)
    assert out2.shape == x2.shape and out2.dtype == x2.dtype
    assert jnp.allclose(out2.astype(jnp.float32), ref2.astype(jnp.float32),
                        atol=1e-2, rtol=1e-2)

    # Medium lane-aligned input: exercises the multi-block (grid=4) split path.
    x3 = jax.random.normal(jax.random.PRNGKey(2), (2, 16, 64, 64),
                           dtype=jnp.float32)
    out3 = smish(x3)
    jax.block_until_ready(out3)
    ref3 = _smish_jnp(x3)
    assert out3.shape == x3.shape and out3.dtype == x3.dtype
    assert jnp.allclose(out3, ref3, atol=1e-5, rtol=1e-5)

    print("KERNEL_OK")
</pallas_src>

<mosaic_0001>
module attributes {stable_mosaic.version = 11 : i64} {
  func.func @_smish_kernel(%arg0: i32, %arg1: memref<8x128xf32, #tpu.memory_space<vmem>>, %arg2: memref<8x128xf32, #tpu.memory_space<vmem>>) attributes {dimension_semantics = [#tpu.dimension_semantics<parallel>], iteration_bounds = array<i64: 2>, scalar_prefetch = 0 : i64, scratch_operands = 0 : i64, tpu.core_type = #tpu.core_type<tc>, window_params = [{transform_indices = @transform_0, window_bounds = array<i64: 8, 128>}, {transform_indices = @transform_1, window_bounds = array<i64: 8, 128>}]} {
    %c0 = arith.constant 0 : index
    %c0_0 = arith.constant 0 : index
    %0 = vector.load %arg1[%c0, %c0_0] : memref<8x128xf32, #tpu.memory_space<vmem>>, vector<8x128xf32>
    %1 = arith.negf %0 : vector<8x128xf32>
    %2 = math.exp %1 : vector<8x128xf32>
    %cst = arith.constant 1.000000e+00 : f32
    %3 = vector.broadcast %cst : f32 to vector<8x128xf32>
    %4 = arith.addf %3, %2 : vector<8x128xf32>
    %5 = arith.divf %3, %4 : vector<8x128xf32>
    %cst_1 = arith.constant 2.000000e+00 : f32
    %6 = vector.broadcast %cst_1 : f32 to vector<8x128xf32>
    %7 = arith.addf %5, %6 : vector<8x128xf32>
    %8 = arith.mulf %5, %7 : vector<8x128xf32>
    %cst_2 = arith.constant 2.000000e+00 : f32
    %9 = vector.broadcast %cst_2 : f32 to vector<8x128xf32>
    %10 = arith.addf %8, %9 : vector<8x128xf32>
    %11 = tpu.reciprocal %10 {approx = true} : vector<8x128xf32> -> vector<8x128xf32>
    %12 = arith.mulf %10, %11 : vector<8x128xf32>
    %cst_3 = arith.constant 2.000000e+00 : f32
    %13 = vector.broadcast %cst_3 : f32 to vector<8x128xf32>
    %14 = arith.subf %13, %12 : vector<8x128xf32>
    %15 = arith.mulf %11, %14 : vector<8x128xf32>
    %16 = arith.mulf %0, %8 : vector<8x128xf32>
    %17 = arith.mulf %16, %15 : vector<8x128xf32>
    %c0_4 = arith.constant 0 : index
    %c0_5 = arith.constant 0 : index
    %18 = vector.load %arg2[%c0_4, %c0_5] : memref<8x128xf32, #tpu.memory_space<vmem>>, vector<8x128xf32>
    tpu.vector_store %arg2[%c0_4, %c0_5], %17 {strides = array<i32>} : memref<8x128xf32, #tpu.memory_space<vmem>>, vector<8x128xf32>,
    return
  }
  func.func @transform_0(%arg0: i32) -> (i32, i32) {
    %c0_i32 = arith.constant 0 : i32
    %c0_i32_0 = arith.constant 0 : i32
    return %arg0, %c0_i32 : i32, i32
  }
  func.func @transform_1(%arg0: i32) -> (i32, i32) {
    %c0_i32 = arith.constant 0 : i32
    %c0_i32_0 = arith.constant 0 : i32
    return %arg0, %c0_i32 : i32, i32
  }
}

</mosaic_0001>

<llo_original>
// kernel: tpu_custom_call.1
$region0: #{tpu_custom_call.1}
  #allocation0 [shape = 'u32[]', space=smem, size = 0x4, offset = 0x4, fixed_abs, tag = 'smem constant byte address 0x4 - core index']
  #allocation1 [shape = 'u32[144,128]{1,0:T(1,128)}', space=vmem, size = 0x12000, scoped, tag = 'internal scratch']
  %s0 = inlined_call_operand.hbm [shape: f32[16,128], index: 0, kind: input, shape index: {}]
  %s1 = inlined_call_operand.hbm [shape: f32[16,128], index: 1, kind: output, shape index: {}]
  %s2 = sld [smem:[#allocation0]]
  $region41: #{tpu_custom_call.1} parent=0
    _
  %s4 = ssub.s32 1, %s2
  %s5 = scalar_select 0, %s4, %s2
  $region1: #{tpu_custom_call.1} parent=0
    #allocation2 [shape = 'u8[8192]{0}', space=vmem, size = 0x2000, scoped, tag = 'input window, operand 0']
    #allocation3 [shape = 's32[2]{0}', space=sflag, size = 0x8, scoped, tag = 'scoped memory for tpu_custom_call.1']
    #allocation4 [shape = 's32[2]{0}', space=sflag, size = 0x8, scoped, tag = 'scoped memory for tpu_custom_call.1']
    #allocation5 [shape = 'u8[8192]{0}', space=vmem, size = 0x2000, scoped, tag = 'output window, operand 0']
    %6 = vsyncpa [#allocation3], 0
    %s7 = scalar_lea.sflag [#allocation3], 1
    %8 = vsyncpa %s7, 0
    %9 = vsyncpa [#allocation4], 0
    %s10 = scalar_lea.sflag [#allocation4], 1
    %11 = vsyncpa %s10, 0
    loop: start=0, step=1, limit=4
    $region2: #{tpu_custom_call.1} parent=1 // loop_pre_header
      _
    $region3: #{tpu_custom_call.1} parent=1 // loop_header
      %s13 = sphi 0, %s17
      %p14 = scmp.ge.s32.totalorder %s13, 4
      %s23 = sphi 0, %s25
      %s26 = sphi 0, %s23
      %s27 = sphi 0, %s26
      %s43 = sphi 0, %s27
      %s49 = sphi 0, %s51
      %s52 = sphi 0, %s49
      %s53 = sphi 0, %s52
      %s69 = sphi 0, %s53
    $region4: #{tpu_custom_call.1} parent=1 // loop_header_branch
      %16 = sbr.rel (%p14) target = $region8
    $region5: #{tpu_custom_call.1} parent=1 // loop_body
      %s18 = ssub.s32 %s13, 1
      %s19 = ssub.s32 %s13, 2
      %s20 = sadd.s32 %s13, 1
      %s21 = ssub.s32 %s13, %s20
      %p22 = scmp.eq.s32.totalorder %s21, 0
      %s24 = sadd.s32 %s23, 1
      %s25 = scalar_select %p22, %s23, %s24
      %p28 = pneg %p22
      %p29 = scmp.eq.s32.totalorder %s13, 1
      %p30 = por %p28, %p29
      %p31 = scmp.ne.s32.totalorder %s23, %s26
      %p32 = scmp.eq.s32.totalorder %s13, 0
      %p33 = por %p31, %p32
      %p34 = scmp.ne.s32.totalorder %s23, %s26
      %p35 = scmp.eq.s32.totalorder %s18, 1
      %p36 = por %p34, %p35
      %p37 = scmp.ne.s32.totalorder %s26, %s27
      %p38 = scmp.eq.s32.totalorder %s18, 0
      %p39 = por %p37, %p38
      %p40 = scmp.ne.s32.totalorder %s26, %s27
      %p41 = scmp.eq.s32.totalorder %s19, 1
      %p42 = por %p40, %p41
      %p44 = scmp.ne.s32.totalorder %s27, %s43
      %p45 = scmp.eq.s32.totalorder %s19, 0
      %p46 = por %p44, %p45
      %s47 = ssub.s32 %s13, %s20
      %p48 = scmp.eq.s32.totalorder %s47, 0
      %s50 = sadd.s32 %s49, 1
      %s51 = scalar_select %p48, %s49, %s50
      %p54 = pneg %p48
      %p55 = scmp.eq.s32.totalorder %s13, 1
      %p56 = por %p54, %p55
      %p57 = scmp.ne.s32.totalorder %s49, %s52
      %p58 = scmp.eq.s32.totalorder %s13, 0
      %p59 = por %p57, %p58
      %p60 = scmp.ne.s32.totalorder %s49, %s52
      %p61 = scmp.eq.s32.totalorder %s18, 1
      %p62 = por %p60, %p61
      %p63 = scmp.ne.s32.totalorder %s52, %s53
      %p64 = scmp.eq.s32.totalorder %s18, 0
      %p65 = por %p63, %p64
      %p66 = scmp.ne.s32.totalorder %s52, %s53
      %p67 = scmp.eq.s32.totalorder %s19, 1
      %p68 = por %p66, %p67
      %p70 = scmp.ne.s32.totalorder %s53, %s69
      %p71 = scmp.eq.s32.totalorder %s19, 0
      %p72 = por %p70, %p71
      %p73 = scmp.le.s32.totalorder 1, %s13
      %p74 = scmp.lt.s32.totalorder %s13, 3
      %p75 = pnand %p73, %p74
      %p76 = pneg %p75
      // Predicated region
      $region9: #{tpu_custom_call.1} parent=5 // pred_check
        _
      $region10: #{tpu_custom_call.1} parent=5 // pred_check_branch
        %78 = sbr.rel (%p75) target = $region12
      $region11: #{tpu_custom_call.1} parent=5 // pred_region
        %s79 = ssub.s32 %s13, 1
      $region12: #{tpu_custom_call.1} parent=5 // pred_fallthru
        _
      %p80 = scmp.lt.s32.totalorder %s13, 2
      // Predicated region
      $region13: #{tpu_custom_call.1} parent=5 // pred_check
        %p81 = pneg %p80
      $region14: #{tpu_custom_call.1} parent=5 // pred_check_branch
        %83 = sbr.rel (%p81) target = $region16
      $region15: #{tpu_custom_call.1} parent=5 // pred_region
        // Predicated region
        $region17: #{tpu_custom_call.1} parent=15 // pred_check
          %p84 = pneg %p33
        $region18: #{tpu_custom_call.1} parent=15 // pred_check_branch
          %86 = sbr.rel (%p84) target = $region20
        $region19: #{tpu_custom_call.1} parent=15 // pred_region
          %s87 = sand.u32 %s23, 1
          %s88 = scalar_lea.sflag [#allocation3], %s87
          %s89 = sand.u32 %s23, 1
          %s90 = smul.addr %s89, 8
          %s91 = scalar_lea.vmem [#allocation2], %s90
          %s93 = ssub.s32 128, 128
          %94 = vsyncadd %s88, %s93
          %s95 = smul.addr %s13, 128
          %s96 = scalar_lea.hbm %s0, %s95
          %s98 = sshll.u32 %s91, 4
          %s99 = int_to_ptr.vmem [resolvable:$true] %s98
          %101 = dma.hbm_to_vmem [thread:$0]  %s96, 128, %s99, %s88
        $region20: #{tpu_custom_call.1} parent=15 // pred_fallthru
          _
      $region16: #{tpu_custom_call.1} parent=5 // pred_fallthru
        _
      %p102 = scmp.le.s32.totalorder 1, %s13
      %p103 = scmp.lt.s32.totalorder %s13, 3
      %p104 = pnand %p102, %p103
      %p105 = pneg %p104
      // Predicated region
      $region21: #{tpu_custom_call.1} parent=5 // pred_check
        _
      $region22: #{tpu_custom_call.1} parent=5 // pred_check_branch
        %107 = sbr.rel (%p104) target = $region24
      $region23: #{tpu_custom_call.1} parent=5 // pred_region
        %s108 = ssub.s32 %s13, 1
        %s109 = sand.u32 %s26, 1
        %s110 = scalar_lea.sflag [#allocation3], %s109
        %s111 = sand.u32 %s26, 1
        %s112 = smul.addr %s111, 8
        %s113 = scalar_lea.vmem [#allocation2], %s112
        // Predicated region
        $region25: #{tpu_custom_call.1} parent=23 // pred_check
          %p114 = pneg %p39
        $region26: #{tpu_custom_call.1} parent=23 // pred_check_branch
          %116 = sbr.rel (%p114) target = $region28
        $region27: #{tpu_custom_call.1} parent=23 // pred_region
          %117 = dma.done %s110, 128
        $region28: #{tpu_custom_call.1} parent=23 // pred_fallthru
          _
        %s118 = sand.u32 %s26, 1
        %s119 = scalar_lea.sflag [#allocation3], %s118
        %s120 = sand.u32 %s26, 1
        %s121 = smul.addr %s120, 8
        %s122 = scalar_lea.vmem [#allocation2], %s121
        %p123 = pneg %p39
        %p124 = pneg %p36
        %p125 = pneg %p65
        %p126 = pneg %p62
        %s127 = sand.u32 %s52, 1
        %s128 = scalar_lea.sflag [#allocation4], %s127
        %s129 = sand.u32 %s52, 1
        %s130 = smul.addr %s129, 8
        %s131 = scalar_lea.vmem [#allocation5], %s130
        %v132 = vld [vmem:[%s113] sm:$0xff]
        %v133 = vxor.u32 %v132, 2147483648
        %v134 = vmul.f32 %v133, 1.442695
        %v135 = vpow.pop %v134
        %v136 = vadd.f32 %v135, 1.0
        %v137 = vrcp.pop %v136
        %v138 = vmul.f32 1.0, %v137
        %v139 = vadd.f32 %v138, 2.0
        %v140 = vmul.f32 %v138, %v139
        %v141 = vadd.f32 %v140, 2.0
        %v142 = vrcp.pop %v141
        %v143 = vmul.f32 %v141, %v142
        %v144 = vsub.f32 2.0, %v143
        %v145 = vmul.f32 %v142, %v144
        %v146 = vmul.f32 %v132, %v140
        %v147 = vmul.f32 %v146, %v145
        %148 = vst [vmem:[%s131] sm:$0xff] %v147
        %s149 = sand.u32 %s52, 1
        %s150 = scalar_lea.sflag [#allocation4], %s149
        %s151 = sand.u32 %s52, 1
        %s152 = smul.addr %s151, 8
        %s153 = scalar_lea.vmem [#allocation5], %s152
        // Predicated region
        $region29: #{tpu_custom_call.1} parent=23 // pred_check
          %p154 = pneg %p62
        $region30: #{tpu_custom_call.1} parent=23 // pred_check_branch
          %156 = sbr.rel (%p154) target = $region32
        $region31: #{tpu_custom_call.1} parent=23 // pred_region
          %s158 = ssub.s32 128, 128
          %159 = vsyncadd %s150, %s158
          %s160 = smul.addr %s18, 128
          %s161 = scalar_lea.hbm %s1, %s160
          %s163 = sshll.u32 %s153, 4
          %s164 = int_to_ptr.vmem [resolvable:$true] %s163
          %166 = dma.vmem_to_hbm [thread:$0]  %s164, 128, %s161, %s150
        $region32: #{tpu_custom_call.1} parent=23 // pred_fallthru
          _
      $region24: #{tpu_custom_call.1} parent=5 // pred_fallthru
        _
      %p167 = scmp.le.s32.totalorder 2, %s13
      // Predicated region
      $region33: #{tpu_custom_call.1} parent=5 // pred_check
        %p168 = pneg %p167
      $region34: #{tpu_custom_call.1} parent=5 // pred_check_branch
        %170 = sbr.rel (%p168) target = $region36
      $region35: #{tpu_custom_call.1} parent=5 // pred_region
        %s171 = ssub.s32 %s13, 2
        // Predicated region
        $region37: #{tpu_custom_call.1} parent=35 // pred_check
          %p172 = pneg %p68
        $region38: #{tpu_custom_call.1} parent=35 // pred_check_branch
          %174 = sbr.rel (%p172) target = $region40
        $region39: #{tpu_custom_call.1} parent=35 // pred_region
          %s175 = sand.u32 %s53, 1
          %s176 = scalar_lea.sflag [#allocation4], %s175
          %s177 = sand.u32 %s53, 1
          %s178 = smul.addr %s177, 8
          %s179 = scalar_lea.vmem [#allocation5], %s178
          %180 = dma.done %s176, 128
        $region40: #{tpu_custom_call.1} parent=35 // pred_fallthru
          _
      $region36: #{tpu_custom_call.1} parent=5 // pred_fallthru
        _
    $region6: #{tpu_custom_call.1} parent=1 // loop_footer
      %s17 = sadd.s32 1, %s13
    $region7: #{tpu_custom_call.1} parent=1 // loop_footer_branch
      %12 = sbr.rel target = $region3
    $region8: #{tpu_custom_call.1} parent=1 // loop_exit
      _
    %181 = vsyncpa [#allocation3], 1
    %s182 = scalar_lea.sflag [#allocation3], 1
    %183 = vsyncpa %s182, 1
    %184 = vsyncpa [#allocation4], 1
    %s185 = scalar_lea.sflag [#allocation4], 1
    %186 = vsyncpa %s185, 1

</llo_original>
